<compile_context>
chip_gen: v7x
topology: tpu7x:2x2x1
jax: 0.10.0
libtpu: 0.0.40
codegen_flags: <defaults>
</compile_context>

<pallas_src>
import functools

import jax
import jax.numpy as jnp
from jax import lax
from jax.experimental import pallas as pl
from jax.experimental.pallas import tpu as pltpu

LEAKY_SLOPE = 0.01   # nn.LeakyReLU default
BN_EPS = 1e-5        # nn.BatchNorm1d default
MAX_TILE_L = 1024    # multiple of 128; per-step VMEM stays tiny on all chips
HALO = 3             # pooled-domain halo: 1 (conv1, d=1) + 2 (conv2, d=2)


def _leaky(x):
    return jnp.where(x >= 0, x, LEAKY_SLOPE * x)


def _downsample_kernel(xw_ref, w1_ref, b1_ref, w2_ref, b2_ref, o_ref, *, l_valid):
    """One (batch, L-tile) grid step.

    xw_ref : (1, 1, Cin, LT+6)  pooled-input window (halo of 3 each side; zeros
                                outside the valid global range [0, l_valid))
    w1_ref : (Cmid, Cin*3)      conv1 weights with BN1 scale folded in
    b1_ref : (Cmid, 1)          folded BN1 bias
    w2_ref : (Cout, Cmid*3)     conv2 (dilation 2) weights with BN2 scale folded in
    b2_ref : (Cout, 1)          folded BN2 bias
    o_ref  : (1, Cout, LT)
    """
    lt = o_ref.shape[2]
    w1_len = lt + 4                                   # conv1 output width (±2 halo for conv2)

    pw = xw_ref[0, 0].astype(jnp.float32)             # (Cin, LT+6), L on lanes
    w1 = w1_ref[...].astype(jnp.float32)
    b1 = b1_ref[...].astype(jnp.float32)
    w2 = w2_ref[...].astype(jnp.float32)
    b2 = b2_ref[...].astype(jnp.float32)

    cin = pw.shape[0]
    cmid = w1.shape[0]

    # ---- conv1 (k=3, dilation 1) + folded BN1: VPU broadcast-FMAs ----
    acc1 = None
    for ci in range(cin):
        for k in range(3):
            tap = pw[ci:ci + 1, k:k + w1_len]                    # (1, LT+4)
            term = w1[:, ci * 3 + k:ci * 3 + k + 1] * tap        # (Cmid, LT+4)
            acc1 = term if acc1 is None else acc1 + term
    h1 = _leaky(acc1 + b1)

    # conv2's 'same' padding zero-pads the *stage-1 output* outside the valid
    # global range: apply a position mask instead of concatenating zero columns.
    t = pl.program_id(1)
    g = t * lt - 2 + lax.broadcasted_iota(jnp.int32, (1, w1_len), 1)
    h1 = jnp.where((g >= 0) & (g < l_valid), h1, 0.0)

    # ---- conv2 (k=3, dilation 2) + folded BN2: VPU broadcast-FMAs ----
    acc2 = None
    for ci in range(cmid):
        for k in range(3):
            tap = h1[ci:ci + 1, 2 * k:2 * k + lt]                # (1, LT)
            term = w2[:, ci * 3 + k:ci * 3 + k + 1] * tap        # (Cout, LT)
            acc2 = term if acc2 is None else acc2 + term
    out = _leaky(acc2 + b2)

    o_ref[0] = out.astype(o_ref.dtype)


@functools.partial(jax.jit, static_argnames=("pool_size",))
def downsample_forward(x_ncl, params, pool_size=2):
    """x_ncl: (B, Cin, L) float32 -> (B, Cout, L // pool_size), NCL throughout."""
    w1, g1, beta1, m1, v1, w2, g2, beta2, m2, v2 = params
    B, Cin, L = x_ncl.shape
    Cmid = w1.shape[0]
    Cout = w2.shape[0]
    Lp = L // pool_size

    # MaxPool1d (single fused XLA pass producing the half-size pooled signal).
    pooled = jnp.max(
        x_ncl[:, :, :Lp * pool_size].reshape(B, Cin, Lp, pool_size), axis=-1)

    # Fold eval-mode BatchNorm into the bias-free conv weights.
    s1 = g1 / jnp.sqrt(v1 + BN_EPS)
    s2 = g2 / jnp.sqrt(v2 + BN_EPS)
    w1f = (w1 * s1[:, None, None]).reshape(Cmid, Cin * 3)
    b1f = (beta1 - m1 * s1)[:, None]
    w2f = (w2 * s2[:, None, None]).reshape(Cout, Cmid * 3)
    b2f = (beta2 - m2 * s2)[:, None]

    # L tiling with a 3-sample halo on the pooled signal.
    if Lp <= MAX_TILE_L:
        lt, n_t = Lp, 1
    else:
        lt = MAX_TILE_L
        n_t = -(-Lp // lt)
    lpp = n_t * lt

    padded = jnp.pad(pooled, ((0, 0), (0, 0), (HALO, lpp - Lp + HALO)))
    # (B, nT, Cin, LT+6): overlapping halo windows built once by XLA, so every
    # grid step is self-contained (no overlapping BlockSpecs / manual halo DMA)
    # and both grid axes can be "parallel".
    windows = jnp.stack(
        [padded[:, :, t * lt:t * lt + lt + 2 * HALO] for t in range(n_t)], axis=1)

    out_pp = pl.pallas_call(
        functools.partial(_downsample_kernel, l_valid=Lp),
        out_shape=jax.ShapeDtypeStruct((B, Cout, lpp), x_ncl.dtype),
        grid_spec=pltpu.PrefetchScalarGridSpec(
            num_scalar_prefetch=0,
            grid=(B, n_t),
            in_specs=[
                pl.BlockSpec((1, 1, Cin, lt + 2 * HALO), lambda b, t: (b, t, 0, 0)),
                pl.BlockSpec((Cmid, Cin * 3), lambda b, t: (0, 0)),
                pl.BlockSpec((Cmid, 1), lambda b, t: (0, 0)),
                pl.BlockSpec((Cout, Cmid * 3), lambda b, t: (0, 0)),
                pl.BlockSpec((Cout, 1), lambda b, t: (0, 0)),
            ],
            out_specs=pl.BlockSpec((1, Cout, lt), lambda b, t: (b, 0, t)),
        ),
        compiler_params=pltpu.CompilerParams(
            dimension_semantics=("parallel", "parallel")),
    )(windows, w1f, b1f, w2f, b2f)

    return out_pp[:, :, :Lp]


def init_params(key, in_channels, out_channels):
    """PyTorch-style params: conv weights (Cout, Cin, K) + BN (gamma, beta, mean, var)."""
    cmid = 3 * in_channels            # DoubleConv default mid_channels
    ks = jax.random.split(key, 10)

    def conv_w(k, cout, cin, ksz):
        bound = 1.0 / (cin * ksz) ** 0.5
        return jax.random.uniform(k, (cout, cin, ksz), jnp.float32, -bound, bound)

    def bn(kg, kb, km, kv, c):
        gamma = jax.random.uniform(kg, (c,), jnp.float32, 0.5, 1.5)
        beta = jax.random.uniform(kb, (c,), jnp.float32, -0.5, 0.5)
        mean = 0.1 * jax.random.normal(km, (c,), jnp.float32)
        var = jax.random.uniform(kv, (c,), jnp.float32, 0.5, 1.5)
        return gamma, beta, mean, var

    w1 = conv_w(ks[0], cmid, in_channels, 3)
    g1, b1, m1, v1 = bn(ks[1], ks[2], ks[3], ks[4], cmid)
    w2 = conv_w(ks[5], out_channels, cmid, 3)
    g2, b2, m2, v2 = bn(ks[6], ks[7], ks[8], ks[9], out_channels)
    return (w1, g1, b1, m1, v1, w2, g2, b2, m2, v2)


def _reference_forward(x_ncl, params, pool_size=2):
    """Pure-JAX reference: MaxPool1d -> (conv-BN-LeakyReLU) x2 (eval-mode BN)."""
    w1, g1, beta1, m1, v1, w2, g2, beta2, m2, v2 = params
    B, Cin, L = x_ncl.shape
    Lp = L // pool_size
    h = jnp.max(x_ncl[:, :, :Lp * pool_size].reshape(B, Cin, Lp, pool_size), axis=-1)

    def conv(h, w, dilation):
        return lax.conv_general_dilated(
            h, w, window_strides=(1,), padding=[(dilation, dilation)],
            rhs_dilation=(dilation,), dimension_numbers=("NCH", "OIH", "NCH"),
            precision=lax.Precision.HIGHEST)

    def bn(h, g, b, m, v):
        return (h - m[None, :, None]) / jnp.sqrt(v[None, :, None] + BN_EPS) \
            * g[None, :, None] + b[None, :, None]

    h = _leaky(bn(conv(h, w1, 1), g1, beta1, m1, v1))
    h = _leaky(bn(conv(h, w2, 2), g2, beta2, m2, v2))
    return h


if __name__ == "__main__":
    key = jax.random.PRNGKey(0)

    # Shapes consistent with the module: B=2, Cin=4 (-> Cmid=12), Cout=8.
    # Second case exercises the L-tiled path (nT > 1) and odd input length.
    for (B, Cin, Cout, L) in [(2, 4, 8, 16), (2, 4, 8, 2601)]:
        kx, kp = jax.random.split(jax.random.fold_in(key, L))
        x = jax.random.normal(kx, (B, Cin, L), dtype=jnp.float32)
        params = init_params(kp, Cin, Cout)

        out = downsample_forward(x, params)
        jax.block_until_ready(out)

        ref = _reference_forward(x, params)
        assert out.shape == (B, Cout, L // 2), out.shape
        err = float(jnp.max(jnp.abs(out - ref)))
        assert jnp.allclose(out, ref, atol=1e-4, rtol=1e-4), err

    print("KERNEL_OK")
</pallas_src>

<mosaic_0001>
module attributes {stable_mosaic.version = 11 : i64} {
  func.func @_downsample_kernel(%arg0: i32, %arg1: i32, %arg2: memref<1x1x4x14xf32, #tpu.memory_space<vmem>>, %arg3: memref<12x12xf32, #tpu.memory_space<vmem>>, %arg4: memref<12x1xf32, #tpu.memory_space<vmem>>, %arg5: memref<8x36xf32, #tpu.memory_space<vmem>>, %arg6: memref<8x1xf32, #tpu.memory_space<vmem>>, %arg7: memref<1x8x8xf32, #tpu.memory_space<vmem>>) attributes {dimension_semantics = [#tpu.dimension_semantics<parallel>, #tpu.dimension_semantics<parallel>], iteration_bounds = array<i64: 2, 1>, scalar_prefetch = 0 : i64, scratch_operands = 0 : i64, tpu.core_type = #tpu.core_type<tc>, window_params = [{transform_indices = @transform_0, window_bounds = array<i64: 1, 1, 4, 14>}, {pipeline_mode = #tpu.pipeline_mode<synchronous>, transform_indices = @transform_1, window_bounds = array<i64: 12, 12>}, {pipeline_mode = #tpu.pipeline_mode<synchronous>, transform_indices = @transform_2, window_bounds = array<i64: 12, 1>}, {pipeline_mode = #tpu.pipeline_mode<synchronous>, transform_indices = @transform_3, window_bounds = array<i64: 8, 36>}, {pipeline_mode = #tpu.pipeline_mode<synchronous>, transform_indices = @transform_4, window_bounds = array<i64: 8, 1>}, {transform_indices = @transform_5, window_bounds = array<i64: 1, 8, 8>}]} {
    %c0 = arith.constant 0 : index
    %c0_0 = arith.constant 0 : index
    %c0_1 = arith.constant 0 : index
    %c0_2 = arith.constant 0 : index
    %0 = vector.load %arg2[%c0, %c0_0, %c0_1, %c0_2] : memref<1x1x4x14xf32, #tpu.memory_space<vmem>>, vector<1x1x4x14xf32>
    %1 = vector.shape_cast %0 : vector<1x1x4x14xf32> to vector<4x14xf32>
    %c0_3 = arith.constant 0 : index
    %c0_4 = arith.constant 0 : index
    %2 = vector.load %arg3[%c0_3, %c0_4] : memref<12x12xf32, #tpu.memory_space<vmem>>, vector<12x12xf32>
    %c0_5 = arith.constant 0 : index
    %c0_6 = arith.constant 0 : index
    %3 = vector.load %arg4[%c0_5, %c0_6] : memref<12x1xf32, #tpu.memory_space<vmem>>, vector<12x1xf32>
    %c0_7 = arith.constant 0 : index
    %c0_8 = arith.constant 0 : index
    %4 = vector.load %arg5[%c0_7, %c0_8] : memref<8x36xf32, #tpu.memory_space<vmem>>, vector<8x36xf32>
    %c0_9 = arith.constant 0 : index
    %c0_10 = arith.constant 0 : index
    %5 = vector.load %arg6[%c0_9, %c0_10] : memref<8x1xf32, #tpu.memory_space<vmem>>, vector<8x1xf32>
    %6 = vector.extract_strided_slice %1 {offsets = [0, 0], sizes = [1, 12], strides = [1, 1]} : vector<4x14xf32> to vector<1x12xf32>
    %7 = vector.extract_strided_slice %2 {offsets = [0, 0], sizes = [12, 1], strides = [1, 1]} : vector<12x12xf32> to vector<12x1xf32>
    %8 = vector.broadcast %7 : vector<12x1xf32> to vector<12x12xf32>
    %9 = vector.broadcast %6 : vector<1x12xf32> to vector<12x12xf32>
    %10 = arith.mulf %8, %9 : vector<12x12xf32>
    %11 = vector.extract_strided_slice %1 {offsets = [0, 1], sizes = [1, 12], strides = [1, 1]} : vector<4x14xf32> to vector<1x12xf32>
    %12 = vector.extract_strided_slice %2 {offsets = [0, 1], sizes = [12, 1], strides = [1, 1]} : vector<12x12xf32> to vector<12x1xf32>
    %13 = vector.broadcast %12 : vector<12x1xf32> to vector<12x12xf32>
    %14 = vector.broadcast %11 : vector<1x12xf32> to vector<12x12xf32>
    %15 = arith.mulf %13, %14 : vector<12x12xf32>
    %16 = arith.addf %10, %15 : vector<12x12xf32>
    %17 = vector.extract_strided_slice %1 {offsets = [0, 2], sizes = [1, 12], strides = [1, 1]} : vector<4x14xf32> to vector<1x12xf32>
    %18 = vector.extract_strided_slice %2 {offsets = [0, 2], sizes = [12, 1], strides = [1, 1]} : vector<12x12xf32> to vector<12x1xf32>
    %19 = vector.broadcast %18 : vector<12x1xf32> to vector<12x12xf32>
    %20 = vector.broadcast %17 : vector<1x12xf32> to vector<12x12xf32>
    %21 = arith.mulf %19, %20 : vector<12x12xf32>
    %22 = arith.addf %16, %21 : vector<12x12xf32>
    %23 = vector.extract_strided_slice %1 {offsets = [1, 0], sizes = [1, 12], strides = [1, 1]} : vector<4x14xf32> to vector<1x12xf32>
    %24 = vector.extract_strided_slice %2 {offsets = [0, 3], sizes = [12, 1], strides = [1, 1]} : vector<12x12xf32> to vector<12x1xf32>
    %25 = vector.broadcast %24 : vector<12x1xf32> to vector<12x12xf32>
    %26 = vector.broadcast %23 : vector<1x12xf32> to vector<12x12xf32>
    %27 = arith.mulf %25, %26 : vector<12x12xf32>
    %28 = arith.addf %22, %27 : vector<12x12xf32>
    %29 = vector.extract_strided_slice %1 {offsets = [1, 1], sizes = [1, 12], strides = [1, 1]} : vector<4x14xf32> to vector<1x12xf32>
    %30 = vector.extract_strided_slice %2 {offsets = [0, 4], sizes = [12, 1], strides = [1, 1]} : vector<12x12xf32> to vector<12x1xf32>
    %31 = vector.broadcast %30 : vector<12x1xf32> to vector<12x12xf32>
    %32 = vector.broadcast %29 : vector<1x12xf32> to vector<12x12xf32>
    %33 = arith.mulf %31, %32 : vector<12x12xf32>
    %34 = arith.addf %28, %33 : vector<12x12xf32>
    %35 = vector.extract_strided_slice %1 {offsets = [1, 2], sizes = [1, 12], strides = [1, 1]} : vector<4x14xf32> to vector<1x12xf32>
    %36 = vector.extract_strided_slice %2 {offsets = [0, 5], sizes = [12, 1], strides = [1, 1]} : vector<12x12xf32> to vector<12x1xf32>
    %37 = vector.broadcast %36 : vector<12x1xf32> to vector<12x12xf32>
    %38 = vector.broadcast %35 : vector<1x12xf32> to vector<12x12xf32>
    %39 = arith.mulf %37, %38 : vector<12x12xf32>
    %40 = arith.addf %34, %39 : vector<12x12xf32>
    %41 = vector.extract_strided_slice %1 {offsets = [2, 0], sizes = [1, 12], strides = [1, 1]} : vector<4x14xf32> to vector<1x12xf32>
    %42 = vector.extract_strided_slice %2 {offsets = [0, 6], sizes = [12, 1], strides = [1, 1]} : vector<12x12xf32> to vector<12x1xf32>
    %43 = vector.broadcast %42 : vector<12x1xf32> to vector<12x12xf32>
    %44 = vector.broadcast %41 : vector<1x12xf32> to vector<12x12xf32>
    %45 = arith.mulf %43, %44 : vector<12x12xf32>
    %46 = arith.addf %40, %45 : vector<12x12xf32>
    %47 = vector.extract_strided_slice %1 {offsets = [2, 1], sizes = [1, 12], strides = [1, 1]} : vector<4x14xf32> to vector<1x12xf32>
    %48 = vector.extract_strided_slice %2 {offsets = [0, 7], sizes = [12, 1], strides = [1, 1]} : vector<12x12xf32> to vector<12x1xf32>
    %49 = vector.broadcast %48 : vector<12x1xf32> to vector<12x12xf32>
    %50 = vector.broadcast %47 : vector<1x12xf32> to vector<12x12xf32>
    %51 = arith.mulf %49, %50 : vector<12x12xf32>
    %52 = arith.addf %46, %51 : vector<12x12xf32>
    %53 = vector.extract_strided_slice %1 {offsets = [2, 2], sizes = [1, 12], strides = [1, 1]} : vector<4x14xf32> to vector<1x12xf32>
    %54 = vector.extract_strided_slice %2 {offsets = [0, 8], sizes = [12, 1], strides = [1, 1]} : vector<12x12xf32> to vector<12x1xf32>
    %55 = vector.broadcast %54 : vector<12x1xf32> to vector<12x12xf32>
    %56 = vector.broadcast %53 : vector<1x12xf32> to vector<12x12xf32>
    %57 = arith.mulf %55, %56 : vector<12x12xf32>
    %58 = arith.addf %52, %57 : vector<12x12xf32>
    %59 = vector.extract_strided_slice %1 {offsets = [3, 0], sizes = [1, 12], strides = [1, 1]} : vector<4x14xf32> to vector<1x12xf32>
    %60 = vector.extract_strided_slice %2 {offsets = [0, 9], sizes = [12, 1], strides = [1, 1]} : vector<12x12xf32> to vector<12x1xf32>
    %61 = vector.broadcast %60 : vector<12x1xf32> to vector<12x12xf32>
    %62 = vector.broadcast %59 : vector<1x12xf32> to vector<12x12xf32>
    %63 = arith.mulf %61, %62 : vector<12x12xf32>
    %64 = arith.addf %58, %63 : vector<12x12xf32>
    %65 = vector.extract_strided_slice %1 {offsets = [3, 1], sizes = [1, 12], strides = [1, 1]} : vector<4x14xf32> to vector<1x12xf32>
    %66 = vector.extract_strided_slice %2 {offsets = [0, 10], sizes = [12, 1], strides = [1, 1]} : vector<12x12xf32> to vector<12x1xf32>
    %67 = vector.broadcast %66 : vector<12x1xf32> to vector<12x12xf32>
    %68 = vector.broadcast %65 : vector<1x12xf32> to vector<12x12xf32>
    %69 = arith.mulf %67, %68 : vector<12x12xf32>
    %70 = arith.addf %64, %69 : vector<12x12xf32>
    %71 = vector.extract_strided_slice %1 {offsets = [3, 2], sizes = [1, 12], strides = [1, 1]} : vector<4x14xf32> to vector<1x12xf32>
    %72 = vector.extract_strided_slice %2 {offsets = [0, 11], sizes = [12, 1], strides = [1, 1]} : vector<12x12xf32> to vector<12x1xf32>
    %73 = vector.broadcast %72 : vector<12x1xf32> to vector<12x12xf32>
    %74 = vector.broadcast %71 : vector<1x12xf32> to vector<12x12xf32>
    %75 = arith.mulf %73, %74 : vector<12x12xf32>
    %76 = arith.addf %70, %75 : vector<12x12xf32>
    %77 = vector.broadcast %3 : vector<12x1xf32> to vector<12x12xf32>
    %78 = arith.addf %76, %77 : vector<12x12xf32>
    %cst = arith.constant 0.000000e+00 : f32
    %79 = vector.broadcast %cst : f32 to vector<12x12xf32>
    %80 = arith.cmpf oge, %78, %79 : vector<12x12xf32>
    %cst_11 = arith.constant 0.00999999977 : f32
    %81 = vector.broadcast %cst_11 : f32 to vector<12x12xf32>
    %82 = arith.mulf %81, %78 : vector<12x12xf32>
    %83 = arith.select %80, %78, %82 : vector<12x12xi1>, vector<12x12xf32>
    %c8_i32 = arith.constant 8 : i32
    %84 = arith.muli %arg1, %c8_i32 : i32
    %c2_i32 = arith.constant 2 : i32
    %85 = arith.subi %84, %c2_i32 : i32
    %86 = tpu.iota {dimensions = array<i32: 1>} : vector<1x12xi32>
    %87 = vector.broadcast %85 : i32 to vector<1x12xi32>
    %88 = arith.addi %87, %86 : vector<1x12xi32>
    %c0_i32 = arith.constant 0 : i32
    %89 = vector.broadcast %c0_i32 : i32 to vector<1x12xi32>
    %90 = arith.cmpi sge, %88, %89 : vector<1x12xi32>
    %c8_i32_12 = arith.constant 8 : i32
    %91 = vector.broadcast %c8_i32_12 : i32 to vector<1x12xi32>
    %92 = arith.cmpi slt, %88, %91 : vector<1x12xi32>
    %93 = arith.andi %90, %92 : vector<1x12xi1>
    %cst_13 = arith.constant 0.000000e+00 : f32
    %94 = vector.shape_cast %93 : vector<1x12xi1> to vector<1x12xi1>
    %95 = vector.broadcast %94 : vector<1x12xi1> to vector<12x12xi1>
    %96 = vector.broadcast %cst_13 : f32 to vector<12x12xf32>
    %97 = arith.select %95, %83, %96 : vector<12x12xi1>, vector<12x12xf32>
    %98 = vector.extract_strided_slice %97 {offsets = [0, 0], sizes = [1, 8], strides = [1, 1]} : vector<12x12xf32> to vector<1x8xf32>
    %99 = vector.extract_strided_slice %4 {offsets = [0, 0], sizes = [8, 1], strides = [1, 1]} : vector<8x36xf32> to vector<8x1xf32>
    %100 = vector.broadcast %99 : vector<8x1xf32> to vector<8x8xf32>
    %101 = vector.broadcast %98 : vector<1x8xf32> to vector<8x8xf32>
    %102 = arith.mulf %100, %101 : vector<8x8xf32>
    %103 = vector.extract_strided_slice %97 {offsets = [0, 2], sizes = [1, 8], strides = [1, 1]} : vector<12x12xf32> to vector<1x8xf32>
    %104 = vector.extract_strided_slice %4 {offsets = [0, 1], sizes = [8, 1], strides = [1, 1]} : vector<8x36xf32> to vector<8x1xf32>
    %105 = vector.broadcast %104 : vector<8x1xf32> to vector<8x8xf32>
    %106 = vector.broadcast %103 : vector<1x8xf32> to vector<8x8xf32>
    %107 = arith.mulf %105, %106 : vector<8x8xf32>
    %108 = arith.addf %102, %107 : vector<8x8xf32>
    %109 = vector.extract_strided_slice %97 {offsets = [0, 4], sizes = [1, 8], strides = [1, 1]} : vector<12x12xf32> to vector<1x8xf32>
    %110 = vector.extract_strided_slice %4 {offsets = [0, 2], sizes = [8, 1], strides = [1, 1]} : vector<8x36xf32> to vector<8x1xf32>
    %111 = vector.broadcast %110 : vector<8x1xf32> to vector<8x8xf32>
    %112 = vector.broadcast %109 : vector<1x8xf32> to vector<8x8xf32>
    %113 = arith.mulf %111, %112 : vector<8x8xf32>
    %114 = arith.addf %108, %113 : vector<8x8xf32>
    %115 = vector.extract_strided_slice %97 {offsets = [1, 0], sizes = [1, 8], strides = [1, 1]} : vector<12x12xf32> to vector<1x8xf32>
    %116 = vector.extract_strided_slice %4 {offsets = [0, 3], sizes = [8, 1], strides = [1, 1]} : vector<8x36xf32> to vector<8x1xf32>
    %117 = vector.broadcast %116 : vector<8x1xf32> to vector<8x8xf32>
    %118 = vector.broadcast %115 : vector<1x8xf32> to vector<8x8xf32>
    %119 = arith.mulf %117, %118 : vector<8x8xf32>
    %120 = arith.addf %114, %119 : vector<8x8xf32>
    %121 = vector.extract_strided_slice %97 {offsets = [1, 2], sizes = [1, 8], strides = [1, 1]} : vector<12x12xf32> to vector<1x8xf32>
    %122 = vector.extract_strided_slice %4 {offsets = [0, 4], sizes = [8, 1], strides = [1, 1]} : vector<8x36xf32> to vector<8x1xf32>
    %123 = vector.broadcast %122 : vector<8x1xf32> to vector<8x8xf32>
    %124 = vector.broadcast %121 : vector<1x8xf32> to vector<8x8xf32>
    %125 = arith.mulf %123, %124 : vector<8x8xf32>
    %126 = arith.addf %120, %125 : vector<8x8xf32>
    %127 = vector.extract_strided_slice %97 {offsets = [1, 4], sizes = [1, 8], strides = [1, 1]} : vector<12x12xf32> to vector<1x8xf32>
    %128 = vector.extract_strided_slice %4 {offsets = [0, 5], sizes = [8, 1], strides = [1, 1]} : vector<8x36xf32> to vector<8x1xf32>
    %129 = vector.broadcast %128 : vector<8x1xf32> to vector<8x8xf32>
    %130 = vector.broadcast %127 : vector<1x8xf32> to vector<8x8xf32>
    %131 = arith.mulf %129, %130 : vector<8x8xf32>
    %132 = arith.addf %126, %131 : vector<8x8xf32>
    %133 = vector.extract_strided_slice %97 {offsets = [2, 0], sizes = [1, 8], strides = [1, 1]} : vector<12x12xf32> to vector<1x8xf32>
    %134 = vector.extract_strided_slice %4 {offsets = [0, 6], sizes = [8, 1], strides = [1, 1]} : vector<8x36xf32> to vector<8x1xf32>
    %135 = vector.broadcast %134 : vector<8x1xf32> to vector<8x8xf32>
    %136 = vector.broadcast %133 : vector<1x8xf32> to vector<8x8xf32>
    %137 = arith.mulf %135, %136 : vector<8x8xf32>
    %138 = arith.addf %132, %137 : vector<8x8xf32>
    %139 = vector.extract_strided_slice %97 {offsets = [2, 2], sizes = [1, 8], strides = [1, 1]} : vector<12x12xf32> to vector<1x8xf32>
    %140 = vector.extract_strided_slice %4 {offsets = [0, 7], sizes = [8, 1], strides = [1, 1]} : vector<8x36xf32> to vector<8x1xf32>
    %141 = vector.broadcast %140 : vector<8x1xf32> to vector<8x8xf32>
    %142 = vector.broadcast %139 : vector<1x8xf32> to vector<8x8xf32>
    %143 = arith.mulf %141, %142 : vector<8x8xf32>
    %144 = arith.addf %138, %143 : vector<8x8xf32>
    %145 = vector.extract_strided_slice %97 {offsets = [2, 4], sizes = [1, 8], strides = [1, 1]} : vector<12x12xf32> to vector<1x8xf32>
    %146 = vector.extract_strided_slice %4 {offsets = [0, 8], sizes = [8, 1], strides = [1, 1]} : vector<8x36xf32> to vector<8x1xf32>
    %147 = vector.broadcast %146 : vector<8x1xf32> to vector<8x8xf32>
    %148 = vector.broadcast %145 : vector<1x8xf32> to vector<8x8xf32>
    %149 = arith.mulf %147, %148 : vector<8x8xf32>
    %150 = arith.addf %144, %149 : vector<8x8xf32>
    %151 = vector.extract_strided_slice %97 {offsets = [3, 0], sizes = [1, 8], strides = [1, 1]} : vector<12x12xf32> to vector<1x8xf32>
    %152 = vector.extract_strided_slice %4 {offsets = [0, 9], sizes = [8, 1], strides = [1, 1]} : vector<8x36xf32> to vector<8x1xf32>
    %153 = vector.broadcast %152 : vector<8x1xf32> to vector<8x8xf32>
    %154 = vector.broadcast %151 : vector<1x8xf32> to vector<8x8xf32>
    %155 = arith.mulf %153, %154 : vector<8x8xf32>
    %156 = arith.addf %150, %155 : vector<8x8xf32>
    %157 = vector.extract_strided_slice %97 {offsets = [3, 2], sizes = [1, 8], strides = [1, 1]} : vector<12x12xf32> to vector<1x8xf32>
    %158 = vector.extract_strided_slice %4 {offsets = [0, 10], sizes = [8, 1], strides = [1, 1]} : vector<8x36xf32> to vector<8x1xf32>
    %159 = vector.broadcast %158 : vector<8x1xf32> to vector<8x8xf32>
    %160 = vector.broadcast %157 : vector<1x8xf32> to vector<8x8xf32>
    %161 = arith.mulf %159, %160 : vector<8x8xf32>
    %162 = arith.addf %156, %161 : vector<8x8xf32>
    %163 = vector.extract_strided_slice %97 {offsets = [3, 4], sizes = [1, 8], strides = [1, 1]} : vector<12x12xf32> to vector<1x8xf32>
    %164 = vector.extract_strided_slice %4 {offsets = [0, 11], sizes = [8, 1], strides = [1, 1]} : vector<8x36xf32> to vector<8x1xf32>
    %165 = vector.broadcast %164 : vector<8x1xf32> to vector<8x8xf32>
    %166 = vector.broadcast %163 : vector<1x8xf32> to vector<8x8xf32>
    %167 = arith.mulf %165, %166 : vector<8x8xf32>
    %168 = arith.addf %162, %167 : vector<8x8xf32>
    %169 = vector.extract_strided_slice %97 {offsets = [4, 0], sizes = [1, 8], strides = [1, 1]} : vector<12x12xf32> to vector<1x8xf32>
    %170 = vector.extract_strided_slice %4 {offsets = [0, 12], sizes = [8, 1], strides = [1, 1]} : vector<8x36xf32> to vector<8x1xf32>
    %171 = vector.broadcast %170 : vector<8x1xf32> to vector<8x8xf32>
    %172 = vector.broadcast %169 : vector<1x8xf32> to vector<8x8xf32>
    %173 = arith.mulf %171, %172 : vector<8x8xf32>
    %174 = arith.addf %168, %173 : vector<8x8xf32>
    %175 = vector.extract_strided_slice %97 {offsets = [4, 2], sizes = [1, 8], strides = [1, 1]} : vector<12x12xf32> to vector<1x8xf32>
    %176 = vector.extract_strided_slice %4 {offsets = [0, 13], sizes = [8, 1], strides = [1, 1]} : vector<8x36xf32> to vector<8x1xf32>
    %177 = vector.broadcast %176 : vector<8x1xf32> to vector<8x8xf32>
    %178 = vector.broadcast %175 : vector<1x8xf32> to vector<8x8xf32>
    %179 = arith.mulf %177, %178 : vector<8x8xf32>
    %180 = arith.addf %174, %179 : vector<8x8xf32>
    %181 = vector.extract_strided_slice %97 {offsets = [4, 4], sizes = [1, 8], strides = [1, 1]} : vector<12x12xf32> to vector<1x8xf32>
    %182 = vector.extract_strided_slice %4 {offsets = [0, 14], sizes = [8, 1], strides = [1, 1]} : vector<8x36xf32> to vector<8x1xf32>
    %183 = vector.broadcast %182 : vector<8x1xf32> to vector<8x8xf32>
    %184 = vector.broadcast %181 : vector<1x8xf32> to vector<8x8xf32>
    %185 = arith.mulf %183, %184 : vector<8x8xf32>
    %186 = arith.addf %180, %185 : vector<8x8xf32>
    %187 = vector.extract_strided_slice %97 {offsets = [5, 0], sizes = [1, 8], strides = [1, 1]} : vector<12x12xf32> to vector<1x8xf32>
    %188 = vector.extract_strided_slice %4 {offsets = [0, 15], sizes = [8, 1], strides = [1, 1]} : vector<8x36xf32> to vector<8x1xf32>
    %189 = vector.broadcast %188 : vector<8x1xf32> to vector<8x8xf32>
    %190 = vector.broadcast %187 : vector<1x8xf32> to vector<8x8xf32>
    %191 = arith.mulf %189, %190 : vector<8x8xf32>
    %192 = arith.addf %186, %191 : vector<8x8xf32>
    %193 = vector.extract_strided_slice %97 {offsets = [5, 2], sizes = [1, 8], strides = [1, 1]} : vector<12x12xf32> to vector<1x8xf32>
    %194 = vector.extract_strided_slice %4 {offsets = [0, 16], sizes = [8, 1], strides = [1, 1]} : vector<8x36xf32> to vector<8x1xf32>
    %195 = vector.broadcast %194 : vector<8x1xf32> to vector<8x8xf32>
    %196 = vector.broadcast %193 : vector<1x8xf32> to vector<8x8xf32>
    %197 = arith.mulf %195, %196 : vector<8x8xf32>
    %198 = arith.addf %192, %197 : vector<8x8xf32>
    %199 = vector.extract_strided_slice %97 {offsets = [5, 4], sizes = [1, 8], strides = [1, 1]} : vector<12x12xf32> to vector<1x8xf32>
    %200 = vector.extract_strided_slice %4 {offsets = [0, 17], sizes = [8, 1], strides = [1, 1]} : vector<8x36xf32> to vector<8x1xf32>
    %201 = vector.broadcast %200 : vector<8x1xf32> to vector<8x8xf32>
    %202 = vector.broadcast %199 : vector<1x8xf32> to vector<8x8xf32>
    %203 = arith.mulf %201, %202 : vector<8x8xf32>
    %204 = arith.addf %198, %203 : vector<8x8xf32>
    %205 = vector.extract_strided_slice %97 {offsets = [6, 0], sizes = [1, 8], strides = [1, 1]} : vector<12x12xf32> to vector<1x8xf32>
    %206 = vector.extract_strided_slice %4 {offsets = [0, 18], sizes = [8, 1], strides = [1, 1]} : vector<8x36xf32> to vector<8x1xf32>
    %207 = vector.broadcast %206 : vector<8x1xf32> to vector<8x8xf32>
    %208 = vector.broadcast %205 : vector<1x8xf32> to vector<8x8xf32>
    %209 = arith.mulf %207, %208 : vector<8x8xf32>
    %210 = arith.addf %204, %209 : vector<8x8xf32>
    %211 = vector.extract_strided_slice %97 {offsets = [6, 2], sizes = [1, 8], strides = [1, 1]} : vector<12x12xf32> to vector<1x8xf32>
    %212 = vector.extract_strided_slice %4 {offsets = [0, 19], sizes = [8, 1], strides = [1, 1]} : vector<8x36xf32> to vector<8x1xf32>
    %213 = vector.broadcast %212 : vector<8x1xf32> to vector<8x8xf32>
    %214 = vector.broadcast %211 : vector<1x8xf32> to vector<8x8xf32>
    %215 = arith.mulf %213, %214 : vector<8x8xf32>
    %216 = arith.addf %210, %215 : vector<8x8xf32>
    %217 = vector.extract_strided_slice %97 {offsets = [6, 4], sizes = [1, 8], strides = [1, 1]} : vector<12x12xf32> to vector<1x8xf32>
    %218 = vector.extract_strided_slice %4 {offsets = [0, 20], sizes = [8, 1], strides = [1, 1]} : vector<8x36xf32> to vector<8x1xf32>
    %219 = vector.broadcast %218 : vector<8x1xf32> to vector<8x8xf32>
    %220 = vector.broadcast %217 : vector<1x8xf32> to vector<8x8xf32>
    %221 = arith.mulf %219, %220 : vector<8x8xf32>
    %222 = arith.addf %216, %221 : vector<8x8xf32>
    %223 = vector.extract_strided_slice %97 {offsets = [7, 0], sizes = [1, 8], strides = [1, 1]} : vector<12x12xf32> to vector<1x8xf32>
    %224 = vector.extract_strided_slice %4 {offsets = [0, 21], sizes = [8, 1], strides = [1, 1]} : vector<8x36xf32> to vector<8x1xf32>
    %225 = vector.broadcast %224 : vector<8x1xf32> to vector<8x8xf32>
    %226 = vector.broadcast %223 : vector<1x8xf32> to vector<8x8xf32>
    %227 = arith.mulf %225, %226 : vector<8x8xf32>
    %228 = arith.addf %222, %227 : vector<8x8xf32>
    %229 = vector.extract_strided_slice %97 {offsets = [7, 2], sizes = [1, 8], strides = [1, 1]} : vector<12x12xf32> to vector<1x8xf32>
    %230 = vector.extract_strided_slice %4 {offsets = [0, 22], sizes = [8, 1], strides = [1, 1]} : vector<8x36xf32> to vector<8x1xf32>
    %231 = vector.broadcast %230 : vector<8x1xf32> to vector<8x8xf32>
    %232 = vector.broadcast %229 : vector<1x8xf32> to vector<8x8xf32>
    %233 = arith.mulf %231, %232 : vector<8x8xf32>
    %234 = arith.addf %228, %233 : vector<8x8xf32>
    %235 = vector.extract_strided_slice %97 {offsets = [7, 4], sizes = [1, 8], strides = [1, 1]} : vector<12x12xf32> to vector<1x8xf32>
    %236 = vector.extract_strided_slice %4 {offsets = [0, 23], sizes = [8, 1], strides = [1, 1]} : vector<8x36xf32> to vector<8x1xf32>
    %237 = vector.broadcast %236 : vector<8x1xf32> to vector<8x8xf32>
    %238 = vector.broadcast %235 : vector<1x8xf32> to vector<8x8xf32>
    %239 = arith.mulf %237, %238 : vector<8x8xf32>
    %240 = arith.addf %234, %239 : vector<8x8xf32>
    %241 = vector.extract_strided_slice %97 {offsets = [8, 0], sizes = [1, 8], strides = [1, 1]} : vector<12x12xf32> to vector<1x8xf32>
    %242 = vector.extract_strided_slice %4 {offsets = [0, 24], sizes = [8, 1], strides = [1, 1]} : vector<8x36xf32> to vector<8x1xf32>
    %243 = vector.broadcast %242 : vector<8x1xf32> to vector<8x8xf32>
    %244 = vector.broadcast %241 : vector<1x8xf32> to vector<8x8xf32>
    %245 = arith.mulf %243, %244 : vector<8x8xf32>
    %246 = arith.addf %240, %245 : vector<8x8xf32>
    %247 = vector.extract_strided_slice %97 {offsets = [8, 2], sizes = [1, 8], strides = [1, 1]} : vector<12x12xf32> to vector<1x8xf32>
    %248 = vector.extract_strided_slice %4 {offsets = [0, 25], sizes = [8, 1], strides = [1, 1]} : vector<8x36xf32> to vector<8x1xf32>
    %249 = vector.broadcast %248 : vector<8x1xf32> to vector<8x8xf32>
    %250 = vector.broadcast %247 : vector<1x8xf32> to vector<8x8xf32>
    %251 = arith.mulf %249, %250 : vector<8x8xf32>
    %252 = arith.addf %246, %251 : vector<8x8xf32>
    %253 = vector.extract_strided_slice %97 {offsets = [8, 4], sizes = [1, 8], strides = [1, 1]} : vector<12x12xf32> to vector<1x8xf32>
    %254 = vector.extract_strided_slice %4 {offsets = [0, 26], sizes = [8, 1], strides = [1, 1]} : vector<8x36xf32> to vector<8x1xf32>
    %255 = vector.broadcast %254 : vector<8x1xf32> to vector<8x8xf32>
    %256 = vector.broadcast %253 : vector<1x8xf32> to vector<8x8xf32>
    %257 = arith.mulf %255, %256 : vector<8x8xf32>
    %258 = arith.addf %252, %257 : vector<8x8xf32>
    %259 = vector.extract_strided_slice %97 {offsets = [9, 0], sizes = [1, 8], strides = [1, 1]} : vector<12x12xf32> to vector<1x8xf32>
    %260 = vector.extract_strided_slice %4 {offsets = [0, 27], sizes = [8, 1], strides = [1, 1]} : vector<8x36xf32> to vector<8x1xf32>
    %261 = vector.broadcast %260 : vector<8x1xf32> to vector<8x8xf32>
    %262 = vector.broadcast %259 : vector<1x8xf32> to vector<8x8xf32>
    %263 = arith.mulf %261, %262 : vector<8x8xf32>
    %264 = arith.addf %258, %263 : vector<8x8xf32>
    %265 = vector.extract_strided_slice %97 {offsets = [9, 2], sizes = [1, 8], strides = [1, 1]} : vector<12x12xf32> to vector<1x8xf32>
    %266 = vector.extract_strided_slice %4 {offsets = [0, 28], sizes = [8, 1], strides = [1, 1]} : vector<8x36xf32> to vector<8x1xf32>
    %267 = vector.broadcast %266 : vector<8x1xf32> to vector<8x8xf32>
    %268 = vector.broadcast %265 : vector<1x8xf32> to vector<8x8xf32>
    %269 = arith.mulf %267, %268 : vector<8x8xf32>
    %270 = arith.addf %264, %269 : vector<8x8xf32>
    %271 = vector.extract_strided_slice %97 {offsets = [9, 4], sizes = [1, 8], strides = [1, 1]} : vector<12x12xf32> to vector<1x8xf32>
    %272 = vector.extract_strided_slice %4 {offsets = [0, 29], sizes = [8, 1], strides = [1, 1]} : vector<8x36xf32> to vector<8x1xf32>
    %273 = vector.broadcast %272 : vector<8x1xf32> to vector<8x8xf32>
    %274 = vector.broadcast %271 : vector<1x8xf32> to vector<8x8xf32>
    %275 = arith.mulf %273, %274 : vector<8x8xf32>
    %276 = arith.addf %270, %275 : vector<8x8xf32>
    %277 = vector.extract_strided_slice %97 {offsets = [10, 0], sizes = [1, 8], strides = [1, 1]} : vector<12x12xf32> to vector<1x8xf32>
    %278 = vector.extract_strided_slice %4 {offsets = [0, 30], sizes = [8, 1], strides = [1, 1]} : vector<8x36xf32> to vector<8x1xf32>
    %279 = vector.broadcast %278 : vector<8x1xf32> to vector<8x8xf32>
    %280 = vector.broadcast %277 : vector<1x8xf32> to vector<8x8xf32>
    %281 = arith.mulf %279, %280 : vector<8x8xf32>
    %282 = arith.addf %276, %281 : vector<8x8xf32>
    %283 = vector.extract_strided_slice %97 {offsets = [10, 2], sizes = [1, 8], strides = [1, 1]} : vector<12x12xf32> to vector<1x8xf32>
    %284 = vector.extract_strided_slice %4 {offsets = [0, 31], sizes = [8, 1], strides = [1, 1]} : vector<8x36xf32> to vector<8x1xf32>
    %285 = vector.broadcast %284 : vector<8x1xf32> to vector<8x8xf32>
    %286 = vector.broadcast %283 : vector<1x8xf32> to vector<8x8xf32>
    %287 = arith.mulf %285, %286 : vector<8x8xf32>
    %288 = arith.addf %282, %287 : vector<8x8xf32>
    %289 = vector.extract_strided_slice %97 {offsets = [10, 4], sizes = [1, 8], strides = [1, 1]} : vector<12x12xf32> to vector<1x8xf32>
    %290 = vector.extract_strided_slice %4 {offsets = [0, 32], sizes = [8, 1], strides = [1, 1]} : vector<8x36xf32> to vector<8x1xf32>
    %291 = vector.broadcast %290 : vector<8x1xf32> to vector<8x8xf32>
    %292 = vector.broadcast %289 : vector<1x8xf32> to vector<8x8xf32>
    %293 = arith.mulf %291, %292 : vector<8x8xf32>
    %294 = arith.addf %288, %293 : vector<8x8xf32>
    %295 = vector.extract_strided_slice %97 {offsets = [11, 0], sizes = [1, 8], strides = [1, 1]} : vector<12x12xf32> to vector<1x8xf32>
    %296 = vector.extract_strided_slice %4 {offsets = [0, 33], sizes = [8, 1], strides = [1, 1]} : vector<8x36xf32> to vector<8x1xf32>
    %297 = vector.broadcast %296 : vector<8x1xf32> to vector<8x8xf32>
    %298 = vector.broadcast %295 : vector<1x8xf32> to vector<8x8xf32>
    %299 = arith.mulf %297, %298 : vector<8x8xf32>
    %300 = arith.addf %294, %299 : vector<8x8xf32>
    %301 = vector.extract_strided_slice %97 {offsets = [11, 2], sizes = [1, 8], strides = [1, 1]} : vector<12x12xf32> to vector<1x8xf32>
    %302 = vector.extract_strided_slice %4 {offsets = [0, 34], sizes = [8, 1], strides = [1, 1]} : vector<8x36xf32> to vector<8x1xf32>
    %303 = vector.broadcast %302 : vector<8x1xf32> to vector<8x8xf32>
    %304 = vector.broadcast %301 : vector<1x8xf32> to vector<8x8xf32>
    %305 = arith.mulf %303, %304 : vector<8x8xf32>
    %306 = arith.addf %300, %305 : vector<8x8xf32>
    %307 = vector.extract_strided_slice %97 {offsets = [11, 4], sizes = [1, 8], strides = [1, 1]} : vector<12x12xf32> to vector<1x8xf32>
    %308 = vector.extract_strided_slice %4 {offsets = [0, 35], sizes = [8, 1], strides = [1, 1]} : vector<8x36xf32> to vector<8x1xf32>
    %309 = vector.broadcast %308 : vector<8x1xf32> to vector<8x8xf32>
    %310 = vector.broadcast %307 : vector<1x8xf32> to vector<8x8xf32>
    %311 = arith.mulf %309, %310 : vector<8x8xf32>
    %312 = arith.addf %306, %311 : vector<8x8xf32>
    %313 = vector.broadcast %5 : vector<8x1xf32> to vector<8x8xf32>
    %314 = arith.addf %312, %313 : vector<8x8xf32>
    %cst_14 = arith.constant 0.000000e+00 : f32
    %315 = vector.broadcast %cst_14 : f32 to vector<8x8xf32>
    %316 = arith.cmpf oge, %314, %315 : vector<8x8xf32>
    %cst_15 = arith.constant 0.00999999977 : f32
    %317 = vector.broadcast %cst_15 : f32 to vector<8x8xf32>
    %318 = arith.mulf %317, %314 : vector<8x8xf32>
    %319 = arith.select %316, %314, %318 : vector<8x8xi1>, vector<8x8xf32>
    %c0_16 = arith.constant 0 : index
    %c0_17 = arith.constant 0 : index
    %c0_18 = arith.constant 0 : index
    %320 = vector.load %arg7[%c0_16, %c0_17, %c0_18] : memref<1x8x8xf32, #tpu.memory_space<vmem>>, vector<1x8x8xf32>
    %321 = vector.shape_cast %320 : vector<1x8x8xf32> to vector<8x8xf32>
    %322 = vector.shape_cast %319 : vector<8x8xf32> to vector<1x8x8xf32>
    tpu.vector_store %arg7[%c0_16, %c0_17, %c0_18], %322 {strides = array<i32>} : memref<1x8x8xf32, #tpu.memory_space<vmem>>, vector<1x8x8xf32>,
    return
  }
  func.func @transform_0(%arg0: i32, %arg1: i32) -> (i32, i32, i32, i32) {
    %c0_i32 = arith.constant 0 : i32
    %c0_i32_0 = arith.constant 0 : i32
    %c0_i32_1 = arith.constant 0 : i32
    return %arg0, %arg1, %c0_i32, %c0_i32_0 : i32, i32, i32, i32
  }
  func.func @transform_1(%arg0: i32, %arg1: i32) -> (i32, i32) {
    %c0_i32 = arith.constant 0 : i32
    %c0_i32_0 = arith.constant 0 : i32
    %c0_i32_1 = arith.constant 0 : i32
    return %c0_i32, %c0_i32_0 : i32, i32
  }
  func.func @transform_2(%arg0: i32, %arg1: i32) -> (i32, i32) {
    %c0_i32 = arith.constant 0 : i32
    %c0_i32_0 = arith.constant 0 : i32
    %c0_i32_1 = arith.constant 0 : i32
    return %c0_i32, %c0_i32_0 : i32, i32
  }
  func.func @transform_3(%arg0: i32, %arg1: i32) -> (i32, i32) {
    %c0_i32 = arith.constant 0 : i32
    %c0_i32_0 = arith.constant 0 : i32
    %c0_i32_1 = arith.constant 0 : i32
    return %c0_i32, %c0_i32_0 : i32, i32
  }
  func.func @transform_4(%arg0: i32, %arg1: i32) -> (i32, i32) {
    %c0_i32 = arith.constant 0 : i32
    %c0_i32_0 = arith.constant 0 : i32
    %c0_i32_1 = arith.constant 0 : i32
    return %c0_i32, %c0_i32_0 : i32, i32
  }
  func.func @transform_5(%arg0: i32, %arg1: i32) -> (i32, i32, i32) {
    %c0_i32 = arith.constant 0 : i32
    %c0_i32_0 = arith.constant 0 : i32
    return %arg0, %c0_i32, %arg1 : i32, i32, i32
  }
}

</mosaic_0001>

<llo_original>
// kernel: downsample_forward.1
$region0: #{downsample_forward.1}
  #allocation0 [shape = 'u32[]', space=smem, size = 0x4, offset = 0x4, fixed_abs, tag = 'smem constant byte address 0x4 - core index']
  #allocation1 [shape = 'u32[144,128]{1,0:T(1,128)}', space=vmem, size = 0x12000, scoped, tag = 'internal scratch']
  %s0 = inlined_call_operand.vmem [shape: f32[2,1,4,14], index: 0, kind: input, shape index: {}]
  %s1 = inlined_call_operand.vmem [shape: f32[12,12], index: 1, kind: input, shape index: {}]
  %s2 = inlined_call_operand.vmem [shape: f32[12,1], index: 2, kind: input, shape index: {}]
  %s3 = inlined_call_operand.vmem [shape: f32[8,36], index: 3, kind: input, shape index: {}]
  %s4 = inlined_call_operand.vmem [shape: f32[8,1], index: 4, kind: input, shape index: {}]
  %s5 = inlined_call_operand.hbm [shape: f32[2,8,8], index: 5, kind: output, shape index: {}]
  %s6 = sld [smem:[#allocation0]]
  $region53: #{downsample_forward.1} parent=0
    _
  %s8 = ssub.s32 1, %s6
  %s9 = scalar_select 0, %s8, %s6
  $region1: #{downsample_forward.1} parent=0
    #allocation2 [shape = 'u8[8192]{0}', space=vmem, size = 0x2000, scoped, tag = 'output window, operand 0']
    #allocation3 [shape = 's32[2]{0}', space=sflag, size = 0x8, scoped, tag = 'scoped memory for downsample_forward.1']
    %10 = vsyncpa [#allocation3], 0
    %s11 = scalar_lea.sflag [#allocation3], 1
    %12 = vsyncpa %s11, 0
    loop: start=0, step=1, limit=4
    $region2: #{downsample_forward.1} parent=1 // loop_pre_header
      _
    $region3: #{downsample_forward.1} parent=1 // loop_header
      %s14 = sphi 0, %s18
      %p15 = scmp.ge.s32.totalorder %s14, 4
      %s21 = sphi 0, %s33
      %s22 = sphi 0, %s29
      %s23 = sphi 0, %s21
      %s24 = sphi 0, %s22
      %s25 = sphi 0, %s23
      %s26 = sphi 0, %s24
      %s38 = sphi 0, %s40
      %s41 = sphi 0, %s38
      %s42 = sphi 0, %s41
      %s58 = sphi 0, %s42
      %s62 = sphi 0, %s62
      %s64 = sphi 0, %s62
      %s65 = sphi 0, %s64
      %s79 = sphi 0, %s65
      %s83 = sphi 0, %s83
      %s85 = sphi 0, %s83
      %s86 = sphi 0, %s85
      %s100 = sphi 0, %s86
      %s104 = sphi 0, %s104
      %s106 = sphi 0, %s104
      %s107 = sphi 0, %s106
      %s121 = sphi 0, %s107
      %s125 = sphi 0, %s125
      %s127 = sphi 0, %s125
      %s128 = sphi 0, %s127
      %s142 = sphi 0, %s128
      %s150 = sphi 0, %s152
      %s153 = sphi 0, %s150
      %s154 = sphi 0, %s153
      %s170 = sphi 0, %s154
    $region4: #{downsample_forward.1} parent=1 // loop_header_branch
      %17 = sbr.rel (%p15) target = $region8
    $region5: #{downsample_forward.1} parent=1 // loop_body
      %s19 = ssub.s32 %s14, 1
      %s20 = ssub.s32 %s14, 2
      %s27 = sadd.s32 1, %s22
      %p28 = scmp.ge.s32.totalorder %s27, 1
      %s29 = scalar_select %p28, 0, %s27
      %s30 = sadd.s32 1, %s21
      %s31 = scalar_select %p28, %s30, %s21
      %p32 = scmp.ge.s32.totalorder %s31, 2
      %s33 = scalar_select %p32, 0, %s31
      %s34 = ssub.s32 %s21, %s33
      %s35 = ssub.s32 %s22, %s29
      %s36 = sor.u32 %s34, %s35
      %p37 = scmp.eq.s32.totalorder %s36, 0
      %s39 = sadd.s32 %s38, 1
      %s40 = scalar_select %p37, %s38, %s39
      %p43 = pneg %p37
      %p44 = scmp.eq.s32.totalorder %s14, 1
      %p45 = por %p43, %p44
      %p46 = scmp.ne.s32.totalorder %s38, %s41
      %p47 = scmp.eq.s32.totalorder %s14, 0
      %p48 = por %p46, %p47
      %p49 = scmp.ne.s32.totalorder %s38, %s41
      %p50 = scmp.eq.s32.totalorder %s19, 1
      %p51 = por %p49, %p50
      %p52 = scmp.ne.s32.totalorder %s41, %s42
      %p53 = scmp.eq.s32.totalorder %s19, 0
      %p54 = por %p52, %p53
      %p55 = scmp.ne.s32.totalorder %s41, %s42
      %p56 = scmp.eq.s32.totalorder %s20, 1
      %p57 = por %p55, %p56
      %p59 = scmp.ne.s32.totalorder %s42, %s58
      %p60 = scmp.eq.s32.totalorder %s20, 0
      %p61 = por %p59, %p60
      %s63 = sadd.s32 %s62, 1
      %p66 = scmp.eq.s32.totalorder %s14, 1
      %p67 = scmp.ne.s32.totalorder %s62, %s64
      %p68 = scmp.eq.s32.totalorder %s14, 0
      %p69 = por %p67, %p68
      %p70 = scmp.ne.s32.totalorder %s62, %s64
      %p71 = scmp.eq.s32.totalorder %s19, 1
      %p72 = por %p70, %p71
      %p73 = scmp.ne.s32.totalorder %s64, %s65
      %p74 = scmp.eq.s32.totalorder %s19, 0
      %p75 = por %p73, %p74
      %p76 = scmp.ne.s32.totalorder %s64, %s65
      %p77 = scmp.eq.s32.totalorder %s20, 1
      %p78 = por %p76, %p77
      %p80 = scmp.ne.s32.totalorder %s65, %s79
      %p81 = scmp.eq.s32.totalorder %s20, 0
      %p82 = por %p80, %p81
      %s84 = sadd.s32 %s83, 1
      %p87 = scmp.eq.s32.totalorder %s14, 1
      %p88 = scmp.ne.s32.totalorder %s83, %s85
      %p89 = scmp.eq.s32.totalorder %s14, 0
      %p90 = por %p88, %p89
      %p91 = scmp.ne.s32.totalorder %s83, %s85
      %p92 = scmp.eq.s32.totalorder %s19, 1
      %p93 = por %p91, %p92
      %p94 = scmp.ne.s32.totalorder %s85, %s86
      %p95 = scmp.eq.s32.totalorder %s19, 0
      %p96 = por %p94, %p95
      %p97 = scmp.ne.s32.totalorder %s85, %s86
      %p98 = scmp.eq.s32.totalorder %s20, 1
      %p99 = por %p97, %p98
      %p101 = scmp.ne.s32.totalorder %s86, %s100
      %p102 = scmp.eq.s32.totalorder %s20, 0
      %p103 = por %p101, %p102
      %s105 = sadd.s32 %s104, 1
      %p108 = scmp.eq.s32.totalorder %s14, 1
      %p109 = scmp.ne.s32.totalorder %s104, %s106
      %p110 = scmp.eq.s32.totalorder %s14, 0
      %p111 = por %p109, %p110
      %p112 = scmp.ne.s32.totalorder %s104, %s106
      %p113 = scmp.eq.s32.totalorder %s19, 1
      %p114 = por %p112, %p113
      %p115 = scmp.ne.s32.totalorder %s106, %s107
      %p116 = scmp.eq.s32.totalorder %s19, 0
      %p117 = por %p115, %p116
      %p118 = scmp.ne.s32.totalorder %s106, %s107
      %p119 = scmp.eq.s32.totalorder %s20, 1
      %p120 = por %p118, %p119
      %p122 = scmp.ne.s32.totalorder %s107, %s121
      %p123 = scmp.eq.s32.totalorder %s20, 0
      %p124 = por %p122, %p123
      %s126 = sadd.s32 %s125, 1
      %p129 = scmp.eq.s32.totalorder %s14, 1
      %p130 = scmp.ne.s32.totalorder %s125, %s127
      %p131 = scmp.eq.s32.totalorder %s14, 0
      %p132 = por %p130, %p131
      %p133 = scmp.ne.s32.totalorder %s125, %s127
      %p134 = scmp.eq.s32.totalorder %s19, 1
      %p135 = por %p133, %p134
      %p136 = scmp.ne.s32.totalorder %s127, %s128
      %p137 = scmp.eq.s32.totalorder %s19, 0
      %p138 = por %p136, %p137
      %p139 = scmp.ne.s32.totalorder %s127, %s128
      %p140 = scmp.eq.s32.totalorder %s20, 1
      %p141 = por %p139, %p140
      %p143 = scmp.ne.s32.totalorder %s128, %s142
      %p144 = scmp.eq.s32.totalorder %s20, 0
      %p145 = por %p143, %p144
      %s146 = ssub.s32 %s21, %s33
      %s147 = ssub.s32 %s22, %s29
      %s148 = sor.u32 %s146, %s147
      %p149 = scmp.eq.s32.totalorder %s148, 0
      %s151 = sadd.s32 %s150, 1
      %s152 = scalar_select %p149, %s150, %s151
      %p155 = pneg %p149
      %p156 = scmp.eq.s32.totalorder %s14, 1
      %p157 = por %p155, %p156
      %p158 = scmp.ne.s32.totalorder %s150, %s153
      %p159 = scmp.eq.s32.totalorder %s14, 0
      %p160 = por %p158, %p159
      %p161 = scmp.ne.s32.totalorder %s150, %s153
      %p162 = scmp.eq.s32.totalorder %s19, 1
      %p163 = por %p161, %p162
      %p164 = scmp.ne.s32.totalorder %s153, %s154
      %p165 = scmp.eq.s32.totalorder %s19, 0
      %p166 = por %p164, %p165
      %p167 = scmp.ne.s32.totalorder %s153, %s154
      %p168 = scmp.eq.s32.totalorder %s20, 1
      %p169 = por %p167, %p168
      %p171 = scmp.ne.s32.totalorder %s154, %s170
      %p172 = scmp.eq.s32.totalorder %s20, 0
      %p173 = por %p171, %p172
      %p174 = scmp.le.s32.totalorder 1, %s14
      %p175 = scmp.lt.s32.totalorder %s14, 3
      %p176 = pnand %p174, %p175
      %p177 = pneg %p176
      // Predicated region
      $region9: #{downsample_forward.1} parent=5 // pred_check
        _
      $region10: #{downsample_forward.1} parent=5 // pred_check_branch
        %179 = sbr.rel (%p176) target = $region12
      $region11: #{downsample_forward.1} parent=5 // pred_region
        %s180 = ssub.s32 %s14, 1
        // Predicated region
        $region13: #{downsample_forward.1} parent=11 // pred_check
          %p181 = pneg %p75
        $region14: #{downsample_forward.1} parent=11 // pred_check_branch
          %183 = sbr.rel (%p181) target = $region16
        $region15: #{downsample_forward.1} parent=11 // pred_region
          _
        $region16: #{downsample_forward.1} parent=11 // pred_fallthru
          _
        // Predicated region
        $region17: #{downsample_forward.1} parent=11 // pred_check
          %p184 = pneg %p96
        $region18: #{downsample_forward.1} parent=11 // pred_check_branch
          %186 = sbr.rel (%p184) target = $region20
        $region19: #{downsample_forward.1} parent=11 // pred_region
          _
        $region20: #{downsample_forward.1} parent=11 // pred_fallthru
          _
        // Predicated region
        $region21: #{downsample_forward.1} parent=11 // pred_check
          %p187 = pneg %p117
        $region22: #{downsample_forward.1} parent=11 // pred_check_branch
          %189 = sbr.rel (%p187) target = $region24
        $region23: #{downsample_forward.1} parent=11 // pred_region
          _
        $region24: #{downsample_forward.1} parent=11 // pred_fallthru
          _
        // Predicated region
        $region25: #{downsample_forward.1} parent=11 // pred_check
          %p190 = pneg %p138
        $region26: #{downsample_forward.1} parent=11 // pred_check_branch
          %192 = sbr.rel (%p190) target = $region28
        $region27: #{downsample_forward.1} parent=11 // pred_region
          _
        $region28: #{downsample_forward.1} parent=11 // pred_fallthru
          _
      $region12: #{downsample_forward.1} parent=5 // pred_fallthru
        _
      %p193 = scmp.lt.s32.totalorder %s14, 2
      // Predicated region
      $region29: #{downsample_forward.1} parent=5 // pred_check
        %p194 = pneg %p193
      $region30: #{downsample_forward.1} parent=5 // pred_check_branch
        %196 = sbr.rel (%p194) target = $region32
      $region31: #{downsample_forward.1} parent=5 // pred_region
        // Predicated region
        $region33: #{downsample_forward.1} parent=31 // pred_check
          %p197 = pneg %p48
        $region34: #{downsample_forward.1} parent=31 // pred_check_branch
          %199 = sbr.rel (%p197) target = $region36
        $region35: #{downsample_forward.1} parent=31 // pred_region
          %p200 = scmp.lt.s32.totalorder %s21, 1
          %s201 = scalar_select %p200, %s21, 1
          %p202 = scmp.lt.s32.totalorder %s22, 0
          %s203 = scalar_select %p202, %s22, 0
          %s204 = sadd.s32 %s203, %s201
          %s205 = smul.addr %s204, 4
          %s206 = scalar_lea.vmem %s0, %s205
        $region36: #{downsample_forward.1} parent=31 // pred_fallthru
          _
      $region32: #{downsample_forward.1} parent=5 // pred_fallthru
        _
      %p207 = scmp.le.s32.totalorder 1, %s14
      %p208 = scmp.lt.s32.totalorder %s14, 3
      %p209 = pnand %p207, %p208
      %p210 = pneg %p209
      // Predicated region
      $region37: #{downsample_forward.1} parent=5 // pred_check
        _
      $region38: #{downsample_forward.1} parent=5 // pred_check_branch
        %212 = sbr.rel (%p209) target = $region40
      $region39: #{downsample_forward.1} parent=5 // pred_region
        %s213 = ssub.s32 %s14, 1
        %p214 = scmp.lt.s32.totalorder %s23, 1
        %s215 = scalar_select %p214, %s23, 1
        %p216 = scmp.lt.s32.totalorder %s24, 0
        %s217 = scalar_select %p216, %s24, 0
        %s218 = sadd.s32 %s217, %s215
        %s219 = smul.addr %s218, 4
        %s220 = scalar_lea.vmem %s0, %s219
        %p221 = pneg %p54
        %p222 = pneg %p51
        %p223 = pneg %p75
        %p224 = pneg %p72
        %p225 = pneg %p96
        %p226 = pneg %p93
        %p227 = pneg %p117
        %p228 = pneg %p114
        %p229 = pneg %p138
        %p230 = pneg %p135
        %p231 = pneg %p166
        %p232 = pneg %p163
        %s233 = sand.u32 %s153, 1
        %s234 = scalar_lea.sflag [#allocation3], %s233
        %s235 = sand.u32 %s153, 1
        %s236 = smul.addr %s235, 8
        %s237 = scalar_lea.vmem [#allocation2], %s236
        %p238 = scmp.lt.s32.totalorder %s23, 1
        %s239 = scalar_select %p238, %s23, 1
        %p240 = scmp.lt.s32.totalorder %s24, 0
        %s241 = scalar_select %p240, %s24, 0
        %s242 = sadd.s32 %s241, %s239
        %s243 = smul.addr %s242, 4
        %s244 = scalar_lea.vmem %s0, %s243
        %v245 = vld [vmem:[%s244] sm:$0xf]
        %v246 = vld [vmem:[%s1] sm:$0xff]
        %v247 = vld [vmem:[%s1 + $0x8] sm:$0xf]
        %v248 = vld [vmem:[%s2] sm:$0xff]
        %v249 = vld [vmem:[%s2 + $0x8] sm:$0xf]
        %v250 = vld [vmem:[%s3] sm:$0xff]
        %v251 = vld [vmem:[%s4] sm:$0xff]
        %253 = vset.pattern.permute.xlu0 0
        %254 = vperm.xlu0 %253, %v246
        %v255 = vpop.permute.xlu0 %254
        %258 = vset.pattern.permute.xlu0 0
        %259 = vperm.xlu0 %258, %v247
        %v260 = vpop.permute.xlu0 %259
        %v262 = vlaneseq
        %v263 = vshrl.u32 %v262, 7
        %v264 = vsub.s32 0, %v263
        %v265 = vrot.slane %v245, %v264
        %v266 = vmul.f32 %v255, %v265
        %v267 = vmul.f32 %v260, %v265
        %268 = vset.pattern.permute.xlu0 1
        %269 = vperm.xlu0 %268, %v246
        %v270 = vpop.permute.xlu0 %269
        %272 = vset.pattern.permute.xlu0 1
        %273 = vperm.xlu0 %272, %v247
        %v274 = vpop.permute.xlu0 %273
        %v276 = vmul.f32 %v270, %v265
        %v277 = vmul.f32 %v274, %v265
        %280 = vrot.lane.b32.xlu0 %v276, 127
        %v281 = vpop.permute.xlu0 %280
        %282 = vrot.lane.b32.xlu0 %v277, 127
        %v283 = vpop.permute.xlu0 %282
        %v286 = vadd.f32 %v266, %v281
        %v287 = vadd.f32 %v267, %v283
        %288 = vset.pattern.permute.xlu0 2
        %289 = vperm.xlu0 %288, %v246
        %v290 = vpop.permute.xlu0 %289
        %292 = vset.pattern.permute.xlu0 2
        %293 = vperm.xlu0 %292, %v247
        %v294 = vpop.permute.xlu0 %293
        %v296 = vmul.f32 %v290, %v265
        %v297 = vmul.f32 %v294, %v265
        %300 = vrot.lane.b32.xlu0 %v296, 126
        %v301 = vpop.permute.xlu0 %300
        %302 = vrot.lane.b32.xlu0 %v297, 126
        %v303 = vpop.permute.xlu0 %302
        %v306 = vadd.f32 %v286, %v301
        %v307 = vadd.f32 %v287, %v303
        %308 = vset.pattern.permute.xlu0 3
        %309 = vperm.xlu0 %308, %v246
        %v310 = vpop.permute.xlu0 %309
        %312 = vset.pattern.permute.xlu0 3
        %313 = vperm.xlu0 %312, %v247
        %v314 = vpop.permute.xlu0 %313
        %v316 = vlaneseq
        %v317 = vshrl.u32 %v316, 7
        %v318 = vsub.s32 1, %v317
        %v319 = vrot.slane %v245, %v318
        %v320 = vmul.f32 %v310, %v319
        %v321 = vmul.f32 %v314, %v319
        %v322 = vadd.f32 %v306, %v320
        %v323 = vadd.f32 %v307, %v321
        %324 = vset.pattern.permute.xlu0 4
        %325 = vperm.xlu0 %324, %v246
        %v326 = vpop.permute.xlu0 %325
        %328 = vset.pattern.permute.xlu0 4
        %329 = vperm.xlu0 %328, %v247
        %v330 = vpop.permute.xlu0 %329
        %v332 = vmul.f32 %v326, %v319
        %v333 = vmul.f32 %v330, %v319
        %336 = vrot.lane.b32.xlu0 %v332, 127
        %v337 = vpop.permute.xlu0 %336
        %338 = vrot.lane.b32.xlu0 %v333, 127
        %v339 = vpop.permute.xlu0 %338
        %v342 = vadd.f32 %v322, %v337
        %v343 = vadd.f32 %v323, %v339
        %344 = vset.pattern.permute.xlu0 5
        %345 = vperm.xlu0 %344, %v246
        %v346 = vpop.permute.xlu0 %345
        %348 = vset.pattern.permute.xlu0 5
        %349 = vperm.xlu0 %348, %v247
        %v350 = vpop.permute.xlu0 %349
        %v352 = vmul.f32 %v346, %v319
        %v353 = vmul.f32 %v350, %v319
        %356 = vrot.lane.b32.xlu0 %v352, 126
        %v357 = vpop.permute.xlu0 %356
        %358 = vrot.lane.b32.xlu0 %v353, 126
        %v359 = vpop.permute.xlu0 %358
        %v362 = vadd.f32 %v342, %v357
        %v363 = vadd.f32 %v343, %v359
        %364 = vset.pattern.permute.xlu0 6
        %365 = vperm.xlu0 %364, %v246
        %v366 = vpop.permute.xlu0 %365
        %368 = vset.pattern.permute.xlu0 6
        %369 = vperm.xlu0 %368, %v247
        %v370 = vpop.permute.xlu0 %369
        %v372 = vlaneseq
        %v373 = vshrl.u32 %v372, 7
        %v374 = vsub.s32 2, %v373
        %v375 = vrot.slane %v245, %v374
        %v376 = vmul.f32 %v366, %v375
        %v377 = vmul.f32 %v370, %v375
        %v378 = vadd.f32 %v362, %v376
        %v379 = vadd.f32 %v363, %v377
        %380 = vset.pattern.permute.xlu0 7
        %381 = vperm.xlu0 %380, %v246
        %v382 = vpop.permute.xlu0 %381
        %384 = vset.pattern.permute.xlu0 7
        %385 = vperm.xlu0 %384, %v247
        %v386 = vpop.permute.xlu0 %385
        %v388 = vmul.f32 %v382, %v375
        %v389 = vmul.f32 %v386, %v375
        %392 = vrot.lane.b32.xlu0 %v388, 127
        %v393 = vpop.permute.xlu0 %392
        %394 = vrot.lane.b32.xlu0 %v389, 127
        %v395 = vpop.permute.xlu0 %394
        %v398 = vadd.f32 %v378, %v393
        %v399 = vadd.f32 %v379, %v395
        %400 = vset.pattern.permute.xlu0 8
        %401 = vperm.xlu0 %400, %v246
        %v402 = vpop.permute.xlu0 %401
        %404 = vset.pattern.permute.xlu0 8
        %405 = vperm.xlu0 %404, %v247
        %v406 = vpop.permute.xlu0 %405
        %v408 = vmul.f32 %v402, %v375
        %v409 = vmul.f32 %v406, %v375
        %412 = vrot.lane.b32.xlu0 %v408, 126
        %v413 = vpop.permute.xlu0 %412
        %414 = vrot.lane.b32.xlu0 %v409, 126
        %v415 = vpop.permute.xlu0 %414
        %v418 = vadd.f32 %v398, %v413
        %v419 = vadd.f32 %v399, %v415
        %420 = vset.pattern.permute.xlu0 9
        %421 = vperm.xlu0 %420, %v246
        %v422 = vpop.permute.xlu0 %421
        %424 = vset.pattern.permute.xlu0 9
        %425 = vperm.xlu0 %424, %v247
        %v426 = vpop.permute.xlu0 %425
        %v428 = vlaneseq
        %v429 = vshrl.u32 %v428, 7
        %v430 = vsub.s32 3, %v429
        %v431 = vrot.slane %v245, %v430
        %v432 = vmul.f32 %v422, %v431
        %v433 = vmul.f32 %v426, %v431
        %v434 = vadd.f32 %v418, %v432
        %v435 = vadd.f32 %v419, %v433
        %436 = vset.pattern.permute.xlu0 10
        %437 = vperm.xlu0 %436, %v246
        %v438 = vpop.permute.xlu0 %437
        %440 = vset.pattern.permute.xlu0 10
        %441 = vperm.xlu0 %440, %v247
        %v442 = vpop.permute.xlu0 %441
        %v444 = vmul.f32 %v438, %v431
        %v445 = vmul.f32 %v442, %v431
        %448 = vrot.lane.b32.xlu0 %v444, 127
        %v449 = vpop.permute.xlu0 %448
        %450 = vrot.lane.b32.xlu0 %v445, 127
        %v451 = vpop.permute.xlu0 %450
        %v454 = vadd.f32 %v434, %v449
        %v455 = vadd.f32 %v435, %v451
        %456 = vset.pattern.permute.xlu0 11
        %457 = vperm.xlu0 %456, %v246
        %v458 = vpop.permute.xlu0 %457
        %460 = vset.pattern.permute.xlu0 11
        %461 = vperm.xlu0 %460, %v247
        %v462 = vpop.permute.xlu0 %461
        %v464 = vmul.f32 %v458, %v431
        %v465 = vmul.f32 %v462, %v431
        %468 = vrot.lane.b32.xlu0 %v464, 126
        %v469 = vpop.permute.xlu0 %468
        %470 = vrot.lane.b32.xlu0 %v465, 126
        %v471 = vpop.permute.xlu0 %470
        %v474 = vadd.f32 %v454, %v469
        %v475 = vadd.f32 %v455, %v471
        %477 = vset.pattern.permute.xlu0 0
        %478 = vperm.xlu0 %477, %v248
        %v479 = vpop.permute.xlu0 %478
        %482 = vset.pattern.permute.xlu0 0
        %483 = vperm.xlu0 %482, %v249
        %v484 = vpop.permute.xlu0 %483
        %v486 = vadd.f32 %v474, %v479
        %v487 = vadd.f32 %v475, %v484
        %vm488 = vcmp.ge.f32.partialorder %v486, 0.0
        %vm489 = vcmp.ge.f32.partialorder %v487, 0.0
        %v490 = vmul.f32 %v486, 0.01
        %v491 = vmul.f32 %v487, 0.01
        %v492 = vsel %vm488, %v486, %v490
        %v493 = vsel %vm489, %v487, %v491
        %s494 = smul.u32 %s24, 8
        %s495 = ssub.s32 %s494, 2
        %v496 = vlaneseq
        %v497 = vand.u32 %v496, 127
        %v498 = vstv %s495
        %v499 = vadd.s32 %v498, %v497
        %vm500 = vcmp.ge.s32.totalorder %v499, 0
        %vm501 = vcmp.lt.s32.totalorder %v499, 8
        %vm502 = vmand %vm500, %vm501
        %v503 = vsel %vm502, 1, 0
        %vm504 = vcmp.eq.s32.totalorder %v503, 1
        %v505 = vsel %vm504, %v492, 0.0
        %v506 = vsel %vm504, %v493, 0.0
        %508 = vset.pattern.permute.xlu0 0
        %509 = vperm.xlu0 %508, %v250
        %v510 = vpop.permute.xlu0 %509
        %v512 = vlaneseq
        %v513 = vshrl.u32 %v512, 7
        %v514 = vsub.s32 0, %v513
        %v515 = vrot.slane %v505, %v514
        %v516 = vmul.f32 %v510, %v515
        %517 = vset.pattern.permute.xlu0 1
        %518 = vperm.xlu0 %517, %v250
        %v519 = vpop.permute.xlu0 %518
        %v521 = vmul.f32 %v519, %v515
        %523 = vrot.lane.b32.xlu0 %v521, 126
        %v524 = vpop.permute.xlu0 %523
        %v526 = vadd.f32 %v516, %v524
        %527 = vset.pattern.permute.xlu0 2
        %528 = vperm.xlu0 %527, %v250
        %v529 = vpop.permute.xlu0 %528
        %v531 = vmul.f32 %v529, %v515
        %533 = vrot.lane.b32.xlu0 %v531, 124
        %v534 = vpop.permute.xlu0 %533
        %v536 = vadd.f32 %v526, %v534
        %537 = vset.pattern.permute.xlu0 3
        %538 = vperm.xlu0 %537, %v250
        %v539 = vpop.permute.xlu0 %538
        %v541 = vlaneseq
        %v542 = vshrl.u32 %v541, 7
        %v543 = vsub.s32 1, %v542
        %v544 = vrot.slane %v505, %v543
        %v545 = vmul.f32 %v539, %v544
        %v546 = vadd.f32 %v536, %v545
        %547 = vset.pattern.permute.xlu0 4
        %548 = vperm.xlu0 %547, %v250
        %v549 = vpop.permute.xlu0 %548
        %v551 = vmul.f32 %v549, %v544
        %553 = vrot.lane.b32.xlu0 %v551, 126
        %v554 = vpop.permute.xlu0 %553
        %v556 = vadd.f32 %v546, %v554
        %557 = vset.pattern.permute.xlu0 5
        %558 = vperm.xlu0 %557, %v250
        %v559 = vpop.permute.xlu0 %558
        %v561 = vmul.f32 %v559, %v544
        %563 = vrot.lane.b32.xlu0 %v561, 124
        %v564 = vpop.permute.xlu0 %563
        %v566 = vadd.f32 %v556, %v564
        %567 = vset.pattern.permute.xlu0 6
        %568 = vperm.xlu0 %567, %v250
        %v569 = vpop.permute.xlu0 %568
        %v571 = vlaneseq
        %v572 = vshrl.u32 %v571, 7
        %v573 = vsub.s32 2, %v572
        %v574 = vrot.slane %v505, %v573
        %v575 = vmul.f32 %v569, %v574
        %v576 = vadd.f32 %v566, %v575
        %577 = vset.pattern.permute.xlu0 7
        %578 = vperm.xlu0 %577, %v250
        %v579 = vpop.permute.xlu0 %578
        %v581 = vmul.f32 %v579, %v574
        %583 = vrot.lane.b32.xlu0 %v581, 126
        %v584 = vpop.permute.xlu0 %583
        %v586 = vadd.f32 %v576, %v584
        %587 = vset.pattern.permute.xlu0 8
        %588 = vperm.xlu0 %587, %v250
        %v589 = vpop.permute.xlu0 %588
        %v591 = vmul.f32 %v589, %v574
        %593 = vrot.lane.b32.xlu0 %v591, 124
        %v594 = vpop.permute.xlu0 %593
        %v596 = vadd.f32 %v586, %v594
        %597 = vset.pattern.permute.xlu0 9
        %598 = vperm.xlu0 %597, %v250
        %v599 = vpop.permute.xlu0 %598
        %v601 = vlaneseq
        %v602 = vshrl.u32 %v601, 7
        %v603 = vsub.s32 3, %v602
        %v604 = vrot.slane %v505, %v603
        %v605 = vmul.f32 %v599, %v604
        %v606 = vadd.f32 %v596, %v605
        %607 = vset.pattern.permute.xlu0 10
        %608 = vperm.xlu0 %607, %v250
        %v609 = vpop.permute.xlu0 %608
        %v611 = vmul.f32 %v609, %v604
        %613 = vrot.lane.b32.xlu0 %v611, 126
        %v614 = vpop.permute.xlu0 %613
        %v616 = vadd.f32 %v606, %v614
        %617 = vset.pattern.permute.xlu0 11
        %618 = vperm.xlu0 %617, %v250
        %v619 = vpop.permute.xlu0 %618
        %v621 = vmul.f32 %v619, %v604
        %623 = vrot.lane.b32.xlu0 %v621, 124
        %v624 = vpop.permute.xlu0 %623
        %v626 = vadd.f32 %v616, %v624
        %627 = vset.pattern.permute.xlu0 12
        %628 = vperm.xlu0 %627, %v250
        %v629 = vpop.permute.xlu0 %628
        %v631 = vlaneseq
        %v632 = vshrl.u32 %v631, 7
        %v633 = vsub.s32 4, %v632
        %v634 = vrot.slane %v505, %v633
        %v635 = vmul.f32 %v629, %v634
        %v636 = vadd.f32 %v626, %v635
        %637 = vset.pattern.permute.xlu0 13
        %638 = vperm.xlu0 %637, %v250
        %v639 = vpop.permute.xlu0 %638
        %v641 = vmul.f32 %v639, %v634
        %643 = vrot.lane.b32.xlu0 %v641, 126
        %v644 = vpop.permute.xlu0 %643
        %v646 = vadd.f32 %v636, %v644
        %647 = vset.pattern.permute.xlu0 14
        %648 = vperm.xlu0 %647, %v250
        %v649 = vpop.permute.xlu0 %648
        %v651 = vmul.f32 %v649, %v634
        %653 = vrot.lane.b32.xlu0 %v651, 124
        %v654 = vpop.permute.xlu0 %653
        %v656 = vadd.f32 %v646, %v654
        %657 = vset.pattern.permute.xlu0 15
        %658 = vperm.xlu0 %657, %v250
        %v659 = vpop.permute.xlu0 %658
        %v661 = vlaneseq
        %v662 = vshrl.u32 %v661, 7
        %v663 = vsub.s32 5, %v662
        %v664 = vrot.slane %v505, %v663
        %v665 = vmul.f32 %v659, %v664
        %v666 = vadd.f32 %v656, %v665
        %667 = vset.pattern.permute.xlu0 16
        %668 = vperm.xlu0 %667, %v250
        %v669 = vpop.permute.xlu0 %668
        %v671 = vmul.f32 %v669, %v664
        %673 = vrot.lane.b32.xlu0 %v671, 126
        %v674 = vpop.permute.xlu0 %673
        %v676 = vadd.f32 %v666, %v674
        %677 = vset.pattern.permute.xlu0 17
        %678 = vperm.xlu0 %677, %v250
        %v679 = vpop.permute.xlu0 %678
        %v681 = vmul.f32 %v679, %v664
        %683 = vrot.lane.b32.xlu0 %v681, 124
        %v684 = vpop.permute.xlu0 %683
        %v686 = vadd.f32 %v676, %v684
        %687 = vset.pattern.permute.xlu0 18
        %688 = vperm.xlu0 %687, %v250
        %v689 = vpop.permute.xlu0 %688
        %v691 = vlaneseq
        %v692 = vshrl.u32 %v691, 7
        %v693 = vsub.s32 6, %v692
        %v694 = vrot.slane %v505, %v693
        %v695 = vmul.f32 %v689, %v694
        %v696 = vadd.f32 %v686, %v695
        %697 = vset.pattern.permute.xlu0 19
        %698 = vperm.xlu0 %697, %v250
        %v699 = vpop.permute.xlu0 %698
        %v701 = vmul.f32 %v699, %v694
        %703 = vrot.lane.b32.xlu0 %v701, 126
        %v704 = vpop.permute.xlu0 %703
        %v706 = vadd.f32 %v696, %v704
        %707 = vset.pattern.permute.xlu0 20
        %708 = vperm.xlu0 %707, %v250
        %v709 = vpop.permute.xlu0 %708
        %v711 = vmul.f32 %v709, %v694
        %713 = vrot.lane.b32.xlu0 %v711, 124
        %v714 = vpop.permute.xlu0 %713
        %v716 = vadd.f32 %v706, %v714
        %717 = vset.pattern.permute.xlu0 21
        %718 = vperm.xlu0 %717, %v250
        %v719 = vpop.permute.xlu0 %718
        %v721 = vlaneseq
        %v722 = vshrl.u32 %v721, 7
        %v723 = vsub.s32 7, %v722
        %v724 = vrot.slane %v505, %v723
        %v725 = vmul.f32 %v719, %v724
        %v726 = vadd.f32 %v716, %v725
        %727 = vset.pattern.permute.xlu0 22
        %728 = vperm.xlu0 %727, %v250
        %v729 = vpop.permute.xlu0 %728
        %v731 = vmul.f32 %v729, %v724
        %733 = vrot.lane.b32.xlu0 %v731, 126
        %v734 = vpop.permute.xlu0 %733
        %v736 = vadd.f32 %v726, %v734
        %737 = vset.pattern.permute.xlu0 23
        %738 = vperm.xlu0 %737, %v250
        %v739 = vpop.permute.xlu0 %738
        %v741 = vmul.f32 %v739, %v724
        %743 = vrot.lane.b32.xlu0 %v741, 124
        %v744 = vpop.permute.xlu0 %743
        %v746 = vadd.f32 %v736, %v744
        %747 = vset.pattern.permute.xlu0 24
        %748 = vperm.xlu0 %747, %v250
        %v749 = vpop.permute.xlu0 %748
        %v751 = vlaneseq
        %v752 = vshrl.u32 %v751, 7
        %v753 = vsub.s32 0, %v752
        %v754 = vrot.slane %v506, %v753
        %v755 = vmul.f32 %v749, %v754
        %v756 = vadd.f32 %v746, %v755
        %757 = vset.pattern.permute.xlu0 25
        %758 = vperm.xlu0 %757, %v250
        %v759 = vpop.permute.xlu0 %758
        %v761 = vmul.f32 %v759, %v754
        %763 = vrot.lane.b32.xlu0 %v761, 126
        %v764 = vpop.permute.xlu0 %763
        %v766 = vadd.f32 %v756, %v764
        %767 = vset.pattern.permute.xlu0 26
        %768 = vperm.xlu0 %767, %v250
        %v769 = vpop.permute.xlu0 %768
        %v771 = vmul.f32 %v769, %v754
        %773 = vrot.lane.b32.xlu0 %v771, 124
        %v774 = vpop.permute.xlu0 %773
        %v776 = vadd.f32 %v766, %v774
        %777 = vset.pattern.permute.xlu0 27
        %778 = vperm.xlu0 %777, %v250
        %v779 = vpop.permute.xlu0 %778
        %v781 = vlaneseq
        %v782 = vshrl.u32 %v781, 7
        %v783 = vsub.s32 1, %v782
        %v784 = vrot.slane %v506, %v783
        %v785 = vmul.f32 %v779, %v784
        %v786 = vadd.f32 %v776, %v785
        %787 = vset.pattern.permute.xlu0 28
        %788 = vperm.xlu0 %787, %v250
        %v789 = vpop.permute.xlu0 %788
        %v791 = vmul.f32 %v789, %v784
        %793 = vrot.lane.b32.xlu0 %v791, 126
        %v794 = vpop.permute.xlu0 %793
        %v796 = vadd.f32 %v786, %v794
        %797 = vset.pattern.permute.xlu0 29
        %798 = vperm.xlu0 %797, %v250
        %v799 = vpop.permute.xlu0 %798
        %v801 = vmul.f32 %v799, %v784
        %803 = vrot.lane.b32.xlu0 %v801, 124
        %v804 = vpop.permute.xlu0 %803
        %v806 = vadd.f32 %v796, %v804
        %807 = vset.pattern.permute.xlu0 30
        %808 = vperm.xlu0 %807, %v250
        %v809 = vpop.permute.xlu0 %808
        %v811 = vlaneseq
        %v812 = vshrl.u32 %v811, 7
        %v813 = vsub.s32 2, %v812
        %v814 = vrot.slane %v506, %v813
        %v815 = vmul.f32 %v809, %v814
        %v816 = vadd.f32 %v806, %v815
        %817 = vset.pattern.permute.xlu0 31
        %818 = vperm.xlu0 %817, %v250
        %v819 = vpop.permute.xlu0 %818
        %v821 = vmul.f32 %v819, %v814
        %823 = vrot.lane.b32.xlu0 %v821, 126
        %v824 = vpop.permute.xlu0 %823
        %v826 = vadd.f32 %v816, %v824
        %827 = vset.pattern.permute.xlu0 32
        %828 = vperm.xlu0 %827, %v250
        %v829 = vpop.permute.xlu0 %828
        %v831 = vmul.f32 %v829, %v814
        %833 = vrot.lane.b32.xlu0 %v831, 124
        %v834 = vpop.permute.xlu0 %833
        %v836 = vadd.f32 %v826, %v834
        %837 = vset.pattern.permute.xlu0 33
        %838 = vperm.xlu0 %837, %v250
        %v839 = vpop.permute.xlu0 %838
        %v841 = vlaneseq
        %v842 = vshrl.u32 %v841, 7
        %v843 = vsub.s32 3, %v842
        %v844 = vrot.slane %v506, %v843
        %v845 = vmul.f32 %v839, %v844
        %v846 = vadd.f32 %v836, %v845
        %847 = vset.pattern.permute.xlu0 34
        %848 = vperm.xlu0 %847, %v250
        %v849 = vpop.permute.xlu0 %848
        %v851 = vmul.f32 %v849, %v844
        %853 = vrot.lane.b32.xlu0 %v851, 126
        %v854 = vpop.permute.xlu0 %853
        %v856 = vadd.f32 %v846, %v854
        %857 = vset.pattern.permute.xlu0 35
        %858 = vperm.xlu0 %857, %v250
        %v859 = vpop.permute.xlu0 %858
        %v861 = vmul.f32 %v859, %v844
        %863 = vrot.lane.b32.xlu0 %v861, 124
        %v864 = vpop.permute.xlu0 %863
        %v866 = vadd.f32 %v856, %v864
        %868 = vset.pattern.permute.xlu0 0
        %869 = vperm.xlu0 %868, %v251
        %v870 = vpop.permute.xlu0 %869
        %v872 = vadd.f32 %v866, %v870
        %vm873 = vcmp.ge.f32.partialorder %v872, 0.0
        %v874 = vmul.f32 %v872, 0.01
        %v875 = vsel %vm873, %v872, %v874
        %vm876 = vcmask 64512
        %877 = vst.msk [vmem:[%s237] sm:$0xff] %vm876, %v875
        %s878 = sand.u32 %s153, 1
        %s879 = scalar_lea.sflag [#allocation3], %s878
        %s880 = sand.u32 %s153, 1
        %s881 = smul.addr %s880, 8
        %s882 = scalar_lea.vmem [#allocation2], %s881
        // Predicated region
        $region41: #{downsample_forward.1} parent=39 // pred_check
          %p883 = pneg %p163
        $region42: #{downsample_forward.1} parent=39 // pred_check_branch
          %885 = sbr.rel (%p883) target = $region44
        $region43: #{downsample_forward.1} parent=39 // pred_region
          %s887 = ssub.s32 128, 128
          %888 = vsyncadd %s879, %s887
          %s889 = sadd.s32 %s24, %s23
          %s890 = smul.addr %s889, 128
          %s891 = scalar_lea.hbm %s5, %s890
          %s893 = sshll.u32 %s882, 4
          %s894 = int_to_ptr.vmem [resolvable:$true] %s893
          %896 = dma.vmem_to_hbm [thread:$0]  %s894, 128, %s891, %s879
        $region44: #{downsample_forward.1} parent=39 // pred_fallthru
          _
      $region40: #{downsample_forward.1} parent=5 // pred_fallthru
        _
      %p897 = scmp.le.s32.totalorder 2, %s14
      // Predicated region
      $region45: #{downsample_forward.1} parent=5 // pred_check
        %p898 = pneg %p897
      $region46: #{downsample_forward.1} parent=5 // pred_check_branch
        %900 = sbr.rel (%p898) target = $region48
      $region47: #{downsample_forward.1} parent=5 // pred_region
        %s901 = ssub.s32 %s14, 2
        // Predicated region
        $region49: #{downsample_forward.1} parent=47 // pred_check
          %p902 = pneg %p169
        $region50: #{downsample_forward.1} parent=47 // pred_check_branch
          %904 = sbr.rel (%p902) target = $region52
        $region51: #{downsample_forward.1} parent=47 // pred_region
          %s905 = sand.u32 %s154, 1
          %s906 = scalar_lea.sflag [#allocation3], %s905
          %s907 = sand.u32 %s154, 1
          %s908 = smul.addr %s907, 8
          %s909 = scalar_lea.vmem [#allocation2], %s908
          %910 = dma.done %s906, 128
        $region52: #{downsample_forward.1} parent=47 // pred_fallthru
          _
      $region48: #{downsample_forward.1} parent=5 // pred_fallthru
        _
    $region6: #{downsample_forward.1} parent=1 // loop_footer
      %s18 = sadd.s32 1, %s14
    $region7: #{downsample_forward.1} parent=1 // loop_footer_branch
      %13 = sbr.rel target = $region3
    $region8: #{downsample_forward.1} parent=1 // loop_exit
      _
    %911 = vsyncpa [#allocation3], 1
    %s912 = scalar_lea.sflag [#allocation3], 1
    %913 = vsyncpa %s912, 1

</llo_original>
